<compile_context>
chip_gen: v5e
topology: v5e:2x2
jax: 0.10.0
libtpu: 0.0.40
codegen_flags: <defaults>
</compile_context>

<pallas_src>
import math

import numpy as np
import jax
import jax.numpy as jnp
from jax.experimental import pallas as pl
from jax.experimental.pallas import tpu as pltpu


# ----------------------------------------------------------------------------
# host-side helpers (Python preprocessing from the original module)
# ----------------------------------------------------------------------------
def _round_up(x, m):
    return ((x + m - 1) // m) * m


def _mm(a, b):
    # f32-accurate host matmul so the pure-JAX reference matches the MXU kernel.
    return jnp.matmul(a, b, precision=jax.lax.Precision.HIGHEST)


def get_factor_lst(extent):
    # TODO(synk): get_factor_lst is an external helper in the original repo;
    # standard "all divisors, ascending" implementation used here.
    extent = int(extent)
    return [i for i in range(1, extent + 1) if extent % i == 0]


def embed_factors(factor_lst, dim=5, k=10):
    # Embed module: base-k digit expansion (least significant digit first), dim wide.
    ret = []
    for factor in factor_lst:
        digits = []
        f = int(factor)
        while f > 0:
            digits.append(f % k)
            f //= k
        digits = (digits + [0] * dim)[:dim]
        ret.append([float(d) for d in digits])
    return ret


def gumbel_softmax(logits, key, temperature=1.0, eps=1e-20):
    # TODO(synk): gumbel_softmax is an external helper in the original repo;
    # standard Gumbel-Softmax (tau=1) used here.
    u = jax.random.uniform(key, logits.shape, minval=0.0, maxval=1.0)
    g = -jnp.log(-jnp.log(u + eps) + eps)
    return jax.nn.softmax((logits + g) / temperature)


def fact(n):
    return math.factorial(n)


def comb(n, m):
    return math.comb(n, m)


# ----------------------------------------------------------------------------
# Pallas kernels
# ----------------------------------------------------------------------------
def _sasd_kernel(n_rows_ref, n_fact_ref,                       # scalar prefetch (SMEM)
                 x_ref, emb_ref, wa_ref, ba_ref, wf_ref, bf_ref,   # VMEM inputs
                 o_ref):                                           # VMEM output
    """One grid step == one candidate of a _split decision (fully fused SASD)."""
    i = pl.program_id(0)

    x = x_ref[0]                                              # (Bp, INp)
    filt = jnp.tanh(jnp.dot(x, wa_ref[0], preferred_element_type=jnp.float32)
                    + ba_ref[0])                              # (Bp, Hp)
    rid = jax.lax.broadcasted_iota(jnp.int32, (x.shape[0], 1), 0)
    filt = jnp.where(rid < n_rows_ref[i], filt, 0.0)          # zero the padded rows

    emb = emb_ref[0]                                          # (Fp, EMBp)
    ffeat = jnp.tanh(jnp.dot(emb, wf_ref[0], preferred_element_type=jnp.float32)
                     + bf_ref[0])                             # (Fp, Hp)

    # filtered @ factor_feature.T, then sum over the axis rows (matches torch order)
    smat = jax.lax.dot_general(filt, ffeat, (((1,), (1,)), ((), ())),
                               preferred_element_type=jnp.float32)   # (Bp, Fp)
    scores = jnp.sum(smat, axis=0, keepdims=True)             # (1, Fp)

    lid = jax.lax.broadcasted_iota(jnp.int32, scores.shape, 1)
    valid = lid < n_fact_ref[i]
    scores = jnp.where(valid, scores, -1e30)                  # mask padded factor lanes
    m = jnp.max(scores, axis=-1, keepdims=True)
    e = jnp.where(valid, jnp.exp(scores - m), 0.0)
    o_ref[0] = e / jnp.sum(e, axis=-1, keepdims=True)         # lane-dense (1, 128) store


def _sard_kernel(n_rows_ref,                                            # SMEM
                 x_ref, wa_ref, ba_ref, wr_ref, br_ref, wc_ref, bct_ref,  # VMEM in
                 o_ref,                                                 # VMEM out
                 pack_scr):                                             # VMEM scratch
    """Fused SARD front-end: axis features -> row filter -> col filter.

    Output is col_filtered^T (128x128, lane dense).  Computing the transposed form
    (Wc @ rf instead of rf^T @ Wc^T) avoids any in-kernel transpose.
    """
    num = x_ref.shape[0]
    bp = x_ref.shape[1]

    pack_scr[...] = jnp.zeros_like(pack_scr)                  # (128, Hp)
    for n in range(num):                                      # static unroll (num is 5 or 10)
        xb = x_ref[n]                                         # (Bp, INp)
        f = jnp.dot(xb, wa_ref[...], preferred_element_type=jnp.float32) + ba_ref[...]
        f = jnp.maximum(f, 0.0)
        rid = jax.lax.broadcasted_iota(jnp.int32, (bp, 1), 0)
        f = jnp.where(rid < n_rows_ref[n], f, 0.0)            # mask padded rows
        pack_scr[pl.ds(n, 1), :] = jnp.sum(f, axis=0, keepdims=True)

    rf = jnp.tanh(jnp.dot(pack_scr[...], wr_ref[...],
                          preferred_element_type=jnp.float32) + br_ref[...])   # (128, 128)
    # col_filtered^T = Wc @ rf ; columns of Wc beyond `num` are zero, so the
    # garbage rows of rf beyond `num` contribute nothing.
    col_t = jnp.dot(wc_ref[...], rf, preferred_element_type=jnp.float32)       # (128, 128)
    o_ref[...] = jnp.tanh(col_t + bct_ref[...])


def sasd_pallas(n_rows, n_factors, x, emb, wa, ba, wf, bf):
    c, bp, inp = x.shape
    _, fp, embp = emb.shape
    hp = wa.shape[2]
    grid_spec = pltpu.PrefetchScalarGridSpec(
        num_scalar_prefetch=2,
        grid=(c,),
        in_specs=[
            pl.BlockSpec((1, bp, inp), lambda i, *_: (i, 0, 0)),
            pl.BlockSpec((1, fp, embp), lambda i, *_: (i, 0, 0)),
            pl.BlockSpec((1, inp, hp), lambda i, *_: (i, 0, 0)),
            pl.BlockSpec((1, 1, hp), lambda i, *_: (i, 0, 0)),
            pl.BlockSpec((1, embp, hp), lambda i, *_: (i, 0, 0)),
            pl.BlockSpec((1, 1, hp), lambda i, *_: (i, 0, 0)),
        ],
        out_specs=pl.BlockSpec((1, 1, fp), lambda i, *_: (i, 0, 0)),
    )
    return pl.pallas_call(
        _sasd_kernel,
        out_shape=jax.ShapeDtypeStruct((c, 1, fp), jnp.float32),
        grid_spec=grid_spec,
        compiler_params=pltpu.CompilerParams(
            dimension_semantics=("parallel",),          # candidates shard across TCs
            vmem_limit_bytes=32 * 1024 * 1024),
    )(n_rows, n_factors, x, emb, wa, ba, wf, bf)


def sard_pallas(n_rows, x, wa, ba, wr, br, wc, bct):
    num, bp, inp = x.shape
    hp = wa.shape[1]
    grid_spec = pltpu.PrefetchScalarGridSpec(
        num_scalar_prefetch=1,
        grid=(1,),
        in_specs=[
            pl.BlockSpec((num, bp, inp), lambda i, *_: (0, 0, 0)),
            pl.BlockSpec((inp, hp), lambda i, *_: (0, 0)),
            pl.BlockSpec((1, hp), lambda i, *_: (0, 0)),
            pl.BlockSpec((hp, 128), lambda i, *_: (0, 0)),
            pl.BlockSpec((1, 128), lambda i, *_: (0, 0)),
            pl.BlockSpec((128, 128), lambda i, *_: (0, 0)),
            pl.BlockSpec((128, 1), lambda i, *_: (0, 0)),
        ],
        out_specs=pl.BlockSpec((128, 128), lambda i, *_: (0, 0)),
        scratch_shapes=[pltpu.VMEM((128, hp), jnp.float32)],
    )
    return pl.pallas_call(
        _sard_kernel,
        out_shape=jax.ShapeDtypeStruct((128, 128), jnp.float32),
        grid_spec=grid_spec,
        compiler_params=pltpu.CompilerParams(
            dimension_semantics=("arbitrary",),
            vmem_limit_bytes=32 * 1024 * 1024),
    )(n_rows, x, wa, ba, wr, br, wc, bct)


# ----------------------------------------------------------------------------
# OpScheduleGPUd5 port
# ----------------------------------------------------------------------------
class OpScheduleGPUd5Pallas:
    """Pallas/JAX port of auto_schedule.models.OpScheduleGPUd5 (forward only)."""

    DIM = 5        # self.dim in the original module
    KP = 128       # SARD k == l == 128 in the original module
    FP = 128       # max #factors supported per extent (lane-padded output width)

    def __init__(self, length, hidden_dim, key):
        self.length = int(length)
        self.hidden = int(hidden_dim)
        self.in_feat = self.DIM + self.length
        # lane/sublane-dense padded sizes (perf feedback: 128-aligned dims)
        self.INP = _round_up(self.in_feat, 128)
        self.EMBP = _round_up(self.DIM, 128)
        self.HP = _round_up(self.hidden, 128)

        self._keys = list(jax.random.split(key, 256))

        def lin(d_in, d_out):
            # nn.Linear default init: U(-1/sqrt(in), 1/sqrt(in)); torch (out, in) layout
            k_w = self._keys.pop()
            k_b = self._keys.pop()
            bound = 1.0 / float(np.sqrt(d_in))
            w = np.asarray(jax.random.uniform(k_w, (d_out, d_in), jnp.float32, -bound, bound))
            b = np.asarray(jax.random.uniform(k_b, (d_out,), jnp.float32, -bound, bound))
            return w, b

        # ---- SASD groups -------------------------------------------------
        # 'spatial' == sasd1..5 (shared by spatial_one AND spatial_three, exactly as
        # in the original where sasd_spatial_in_lst is the same list as ..._out_lst),
        # 'reduce'  == sasd11..15.  sasd6..10 exist in the original but are never used
        # by forward(), so they are not materialized here.
        def sasd_group():
            raw = []
            wa_s = np.zeros((self.DIM, self.INP, self.HP), np.float32)
            ba_s = np.zeros((self.DIM, 1, self.HP), np.float32)
            wf_s = np.zeros((self.DIM, self.EMBP, self.HP), np.float32)
            bf_s = np.zeros((self.DIM, 1, self.HP), np.float32)
            for i in range(self.DIM):
                wa, ba = lin(self.in_feat, self.hidden)
                wf, bf = lin(self.DIM, self.hidden)
                raw.append((wa, ba, wf, bf))
                wa_s[i, :self.in_feat, :self.hidden] = wa.T
                ba_s[i, 0, :self.hidden] = ba
                wf_s[i, :self.DIM, :self.hidden] = wf.T
                bf_s[i, 0, :self.hidden] = bf
            packed = tuple(jnp.asarray(a) for a in (wa_s, ba_s, wf_s, bf_s))
            return raw, packed

        self.sasd_raw, self.sasd_packed = {}, {}
        self.sasd_raw['spatial'], self.sasd_packed['spatial'] = sasd_group()
        self.sasd_raw['reduce'], self.sasd_packed['reduce'] = sasd_group()

        # ---- SARD modules (sard1/2: num=5, outputs=5!; sard3: num=10, outputs=C(10,5)) ----
        def sard(num, outputs):
            wa, ba = lin(self.in_feat, self.hidden)
            wr, br = lin(self.hidden, self.KP)
            wc, bc = lin(num, self.KP)
            wfc, bfc = lin(self.KP * self.KP, outputs)
            raw = (wa, ba, wr, br, wc, bc, wfc, bfc)
            wa_p = np.zeros((self.INP, self.HP), np.float32)
            wa_p[:self.in_feat, :self.hidden] = wa.T
            ba_p = np.zeros((1, self.HP), np.float32)
            ba_p[0, :self.hidden] = ba
            wr_p = np.zeros((self.HP, self.KP), np.float32)
            wr_p[:self.hidden, :] = wr.T
            br_p = br.reshape(1, self.KP)
            wc_p = np.zeros((self.KP, 128), np.float32)
            wc_p[:, :num] = wc
            bct_p = bc.reshape(self.KP, 1)
            packed = tuple(jnp.asarray(a) for a in (wa_p, ba_p, wr_p, br_p, wc_p, bct_p))
            fc = (jnp.asarray(wfc.T), jnp.asarray(bfc))        # (k*l, out), (out,)
            return dict(raw=raw, packed=packed, fc=fc, num=num, outputs=outputs)

        self.sards = [sard(self.DIM, fact(self.DIM)),
                      sard(self.DIM, fact(self.DIM)),
                      sard(self.DIM * 2, comb(self.DIM * 2, self.DIM))]

    # ------------------------------------------------------------------
    # forward dispatch (mirrors OpScheduleGPUd5.forward)
    # ------------------------------------------------------------------
    def forward(self, type_key, candidates, extents, feature, shape,
                random=False, sampling=True, key=None):
        if type_key in ('spatial_one', 'spatial_three'):
            return self._split('spatial', candidates, extents, feature, shape,
                               random, sampling, key)
        if type_key == 'reduce':
            return self._split('reduce', candidates, extents, feature, shape,
                               random, sampling, key)
        if type_key == 'reorder_one':
            return self._reorder(0, candidates, extents, feature, shape,
                                 random, sampling, key, mode=0)
        if type_key == 'reorder_two':
            return self._reorder(1, candidates, extents, feature, shape,
                                 random, sampling, key, mode=0)
        if type_key == 'reorder_three':
            return self._reorder(2, candidates, extents, feature, shape,
                                 random, sampling, key, mode=1)
        raise ValueError('Not support type: {}'.format(type_key))

    # ------------------------------------------------------------------
    def _split(self, group, candidates, extents, feature, shape,
               random, sampling, key):
        assert len(candidates) == self.DIM
        factor_lists = [get_factor_lst(extents[i]) for i in range(self.DIM)]

        if random:   # RASD: softmax over uniform noise, no parameters
            choices, values = [], []
            for i in range(self.DIM):
                key, sub = jax.random.split(key)
                v = jax.nn.softmax(jax.random.uniform(sub, (len(factor_lists[i]),)))
                choices.append(factor_lists[i][int(jnp.argmax(v))])
                values.append(v)
            return choices, values

        rows_per = [[list(shape[op]) + list(c) for op, c in feature[name]]
                    for name in candidates]
        bp = max(8, _round_up(max((len(r) for r in rows_per), default=0), 8))
        x = np.zeros((self.DIM, bp, self.INP), np.float32)
        emb = np.zeros((self.DIM, self.FP, self.EMBP), np.float32)
        n_rows = np.zeros((self.DIM,), np.int32)
        n_fact = np.zeros((self.DIM,), np.int32)
        for i in range(self.DIM):
            rows = rows_per[i]
            n_rows[i] = len(rows)
            if rows:
                x[i, :len(rows), :self.in_feat] = np.asarray(rows, np.float32)
            fl = factor_lists[i]
            assert 1 <= len(fl) <= self.FP
            n_fact[i] = len(fl)
            emb[i, :len(fl), :self.DIM] = np.asarray(
                embed_factors(fl, self.DIM, 10), np.float32)

        wa, ba, wf, bf = self.sasd_packed[group]
        vals = sasd_pallas(jnp.asarray(n_rows), jnp.asarray(n_fact),
                           jnp.asarray(x), jnp.asarray(emb), wa, ba, wf, bf)

        choices, values = [], []
        for i in range(self.DIM):
            v = vals[i, 0, :int(n_fact[i])]
            if sampling:
                key, sub = jax.random.split(key)
                v = gumbel_softmax(jnp.log(v + 1e-20), sub)
            choices.append(factor_lists[i][int(jnp.argmax(v))])
            values.append(v)
        return choices, values

    # ------------------------------------------------------------------
    @staticmethod
    def _reorder_features(candidates, extents, feature, mode):
        name_feature = {}
        for name, value in extents.items():
            out = []
            for op_name, contents in feature[name]:
                tmp = list(contents)
                if mode == 0:
                    tmp[1] *= tmp[0] / value
                    tmp[2] *= tmp[0] / value
                    tmp[0] = value
                elif mode == 1:
                    tmp[0] = value
                else:
                    raise ValueError('mode should in {0, 1}')
                out.append((op_name, tmp))
            name_feature[name] = out
        return [name_feature[name] for name in candidates]

    def _reorder(self, idx, candidates, extents, feature, shape,
                 random, sampling, key, mode=0):
        sard = self.sards[idx]
        if random:   # RARD
            key, sub = jax.random.split(key)
            logits = jax.nn.softmax(jax.random.uniform(sub, (sard['outputs'],)))
            return int(jnp.argmax(logits)), logits

        lst = self._reorder_features(candidates, extents, feature, mode)
        assert len(lst) == sard['num']
        rows_per = [[list(shape[op]) + list(c) for op, c in sub] for sub in lst]
        bp = max(8, _round_up(max((len(r) for r in rows_per), default=0), 8))
        num = sard['num']
        x = np.zeros((num, bp, self.INP), np.float32)
        n_rows = np.zeros((num,), np.int32)
        for n, rows in enumerate(rows_per):
            n_rows[n] = len(rows)
            if rows:
                x[n, :len(rows), :self.in_feat] = np.asarray(rows, np.float32)

        col_t = sard_pallas(jnp.asarray(n_rows), jnp.asarray(x), *sard['packed'])
        # TODO(synk): the flatten -> fc -> softmax epilogue stays in XLA; the
        # (128,128)->(16384,) row-major flatten crosses vreg tiles and has no clean
        # single-tile Mosaic layout.
        wfc_t, bfc = sard['fc']
        flat = jnp.reshape(jnp.transpose(col_t), (-1,))    # == col_filtered.view(-1)
        logits = jax.nn.softmax(_mm(flat, wfc_t) + bfc)
        if sampling:
            key, sub = jax.random.split(key)
            logits = gumbel_softmax(jnp.log(logits + 1e-20), sub)
        return int(jnp.argmax(logits)), logits

    # ------------------------------------------------------------------
    # pure-JAX references (unpadded, no Pallas) used to validate the kernels
    # ------------------------------------------------------------------
    def _split_reference(self, group, candidates, extents, feature, shape):
        choices, values = [], []
        for i, name in enumerate(candidates):
            wa, ba, wf, bf = [jnp.asarray(a) for a in self.sasd_raw[group][i]]
            rows = [list(shape[op]) + list(c) for op, c in feature[name]]
            if rows:
                xb = jnp.asarray(rows, dtype=jnp.float32)
                filt = jnp.tanh(_mm(xb, wa.T) + ba)
            else:
                filt = jnp.zeros((1, self.hidden), jnp.float32)
            fl = get_factor_lst(extents[i])
            ev = jnp.asarray(embed_factors(fl, self.DIM, 10), dtype=jnp.float32)
            ff = jnp.tanh(_mm(ev, wf.T) + bf)
            val = jax.nn.softmax(jnp.sum(_mm(filt, ff.T), axis=0))
            choices.append(fl[int(jnp.argmax(val))])
            values.append(val)
        return choices, values

    def _reorder_reference(self, idx, candidates, extents, feature, shape, mode):
        sard = self.sards[idx]
        wa, ba, wr, br, wc, bc, wfc, bfc = [jnp.asarray(a) for a in sard['raw']]
        lst = self._reorder_features(candidates, extents, feature, mode)
        pack = []
        for sub in lst:
            rows = [list(shape[op]) + list(c) for op, c in sub]
            if rows:
                xb = jnp.asarray(rows, dtype=jnp.float32)
                pack.append(jnp.sum(jax.nn.relu(_mm(xb, wa.T) + ba), axis=0))
            else:
                pack.append(jnp.zeros((self.hidden,), jnp.float32))
        pack = jnp.stack(pack)
        rf = jnp.tanh(_mm(pack, wr.T) + br)
        cf = jnp.tanh(_mm(rf.T, wc.T) + bc)
        logits = jax.nn.softmax(_mm(jnp.reshape(cf, (-1,)), wfc.T) + bfc)
        return int(jnp.argmax(logits)), logits


# ----------------------------------------------------------------------------
if __name__ == "__main__":
    root = jax.random.PRNGKey(0)
    root, pkey = jax.random.split(root)

    length, hidden_dim = 10, 32
    model = OpScheduleGPUd5Pallas(length, hidden_dim, pkey)

    # small deterministic "schedule decision" problem
    candidates = ['op_a', 'op_b', 'op_c', 'op_d', 'op_e']
    shape = {
        'conv': [4.0, 8.0, 16.0, 16.0, 3.0],
        'gemm': [32.0, 32.0, 8.0, 1.0, 1.0],
    }
    feature = {
        'op_a': [('conv', [2.0, 1.0, 0.5, 1.0, 0.0, 0.0, 1.0, 2.0, 0.0, 1.0]),
                 ('gemm', [4.0, 2.0, 1.0, 0.0, 1.0, 0.0, 0.0, 1.0, 1.0, 0.0])],
        'op_b': [('conv', [8.0, 4.0, 2.0, 1.0, 1.0, 0.0, 0.0, 0.0, 1.0, 1.0])],
        'op_c': [('gemm', [16.0, 8.0, 4.0, 0.0, 0.0, 1.0, 1.0, 0.0, 0.0, 1.0]),
                 ('conv', [3.0, 1.5, 1.0, 1.0, 0.0, 1.0, 0.0, 1.0, 0.0, 0.0]),
                 ('gemm', [6.0, 3.0, 2.0, 0.0, 1.0, 1.0, 1.0, 0.0, 1.0, 0.0])],
        'op_d': [],      # exercises the empty-batch branch
        'op_e': [('conv', [12.0, 6.0, 3.0, 1.0, 1.0, 1.0, 0.0, 0.0, 0.0, 1.0])],
    }
    extents_split = [4, 6, 8, 12, 1]
    extents_reorder = {'op_a': 2.0, 'op_b': 4.0, 'op_c': 8.0, 'op_d': 3.0, 'op_e': 6.0}

    # ---- kernel path (sampling/random off -> deterministic, checkable) ----
    ch_sp, vl_sp = model.forward('spatial_one', candidates, extents_split,
                                 feature, shape, random=False, sampling=False)
    ch_rd, vl_rd = model.forward('reduce', candidates, extents_split,
                                 feature, shape, random=False, sampling=False)
    choice_ro, logits_ro = model.forward('reorder_one', candidates, extents_reorder,
                                         feature, shape, random=False, sampling=False)
    jax.block_until_ready((vl_sp, vl_rd, logits_ro))

    # ---- pure-JAX references ----
    ref_ch_sp, ref_vl_sp = model._split_reference('spatial', candidates,
                                                  extents_split, feature, shape)
    ref_ch_rd, ref_vl_rd = model._split_reference('reduce', candidates,
                                                  extents_split, feature, shape)
    ref_choice_ro, ref_logits_ro = model._reorder_reference(
        0, candidates, extents_reorder, feature, shape, mode=0)

    for v, r in zip(vl_sp + vl_rd, ref_vl_sp + ref_vl_rd):
        assert v.shape == r.shape
        assert jnp.allclose(v, r, atol=1e-4, rtol=1e-3), "SASD kernel mismatch"
    assert ch_sp == ref_ch_sp and ch_rd == ref_ch_rd, "SASD choice mismatch"
    assert jnp.allclose(logits_ro, ref_logits_ro, atol=1e-4, rtol=1e-3), "SARD mismatch"
    assert choice_ro == ref_choice_ro, "SARD choice mismatch"

    # sampling path just has to run (Gumbel noise makes it stochastic)
    ch_s, vl_s = model.forward('spatial_one', candidates, extents_split, feature,
                               shape, random=False, sampling=True,
                               key=jax.random.PRNGKey(1))
    jax.block_until_ready(vl_s)

    print("KERNEL_OK")
</pallas_src>

<mosaic_0001>
module attributes {stable_mosaic.version = 11 : i64} {
  func.func @_sasd_kernel(%arg0: i32, %arg1: memref<5xi32, #tpu.memory_space<smem>>, %arg2: memref<5xi32, #tpu.memory_space<smem>>, %arg3: memref<1x8x128xf32, #tpu.memory_space<vmem>>, %arg4: memref<1x128x128xf32, #tpu.memory_space<vmem>>, %arg5: memref<1x128x128xf32, #tpu.memory_space<vmem>>, %arg6: memref<1x1x128xf32, #tpu.memory_space<vmem>>, %arg7: memref<1x128x128xf32, #tpu.memory_space<vmem>>, %arg8: memref<1x1x128xf32, #tpu.memory_space<vmem>>, %arg9: memref<1x1x128xf32, #tpu.memory_space<vmem>>) attributes {dimension_semantics = [#tpu.dimension_semantics<parallel>], iteration_bounds = array<i64: 5>, scalar_prefetch = 2 : i64, scratch_operands = 0 : i64, tpu.core_type = #tpu.core_type<tc>, window_params = [{transform_indices = @transform_0, window_bounds = array<i64: 1, 8, 128>}, {transform_indices = @transform_1, window_bounds = array<i64: 1, 128, 128>}, {transform_indices = @transform_2, window_bounds = array<i64: 1, 128, 128>}, {transform_indices = @transform_3, window_bounds = array<i64: 1, 1, 128>}, {transform_indices = @transform_4, window_bounds = array<i64: 1, 128, 128>}, {transform_indices = @transform_5, window_bounds = array<i64: 1, 1, 128>}, {transform_indices = @transform_6, window_bounds = array<i64: 1, 1, 128>}]} {
    %c0 = arith.constant 0 : index
    %c0_0 = arith.constant 0 : index
    %c0_1 = arith.constant 0 : index
    %0 = vector.load %arg3[%c0, %c0_0, %c0_1] : memref<1x8x128xf32, #tpu.memory_space<vmem>>, vector<1x8x128xf32>
    %1 = vector.shape_cast %0 : vector<1x8x128xf32> to vector<8x128xf32>
    %c0_2 = arith.constant 0 : index
    %c0_3 = arith.constant 0 : index
    %c0_4 = arith.constant 0 : index
    %2 = vector.load %arg5[%c0_2, %c0_3, %c0_4] : memref<1x128x128xf32, #tpu.memory_space<vmem>>, vector<1x128x128xf32>
    %3 = vector.shape_cast %2 : vector<1x128x128xf32> to vector<128x128xf32>
    %cst = arith.constant dense<0.000000e+00> : vector<8x128xf32>
    %4 = tpu.matmul %1, %3, %cst {dimension_numbers = #tpu.dot_dimension_numbers<[1], [0], [0], [1], [0, 0, 1, 1], [], []>} : vector<8x128xf32>, vector<128x128xf32>, vector<8x128xf32> -> vector<8x128xf32>
    %c0_5 = arith.constant 0 : index
    %c0_6 = arith.constant 0 : index
    %c0_7 = arith.constant 0 : index
    %5 = vector.load %arg6[%c0_5, %c0_6, %c0_7] : memref<1x1x128xf32, #tpu.memory_space<vmem>>, vector<1x1x128xf32>
    %6 = vector.shape_cast %5 : vector<1x1x128xf32> to vector<1x128xf32>
    %7 = vector.broadcast %6 : vector<1x128xf32> to vector<8x128xf32>
    %8 = arith.addf %4, %7 : vector<8x128xf32>
    %9 = math.tanh %8 : vector<8x128xf32>
    %10 = tpu.iota {dimensions = array<i32: 0>} : vector<8x1xi32>
    %11 = arith.index_cast %arg0 : i32 to index
    %12 = memref.load %arg1[%11] : memref<5xi32, #tpu.memory_space<smem>>
    %13 = vector.broadcast %12 : i32 to vector<8x1xi32>
    %14 = arith.cmpi slt, %10, %13 : vector<8x1xi32>
    %cst_8 = arith.constant 0.000000e+00 : f32
    %15 = vector.shape_cast %14 : vector<8x1xi1> to vector<8x1xi1>
    %16 = vector.broadcast %15 : vector<8x1xi1> to vector<8x128xi1>
    %17 = vector.broadcast %cst_8 : f32 to vector<8x128xf32>
    %18 = arith.select %16, %9, %17 : vector<8x128xi1>, vector<8x128xf32>
    %c0_9 = arith.constant 0 : index
    %c0_10 = arith.constant 0 : index
    %c0_11 = arith.constant 0 : index
    %19 = vector.load %arg4[%c0_9, %c0_10, %c0_11] : memref<1x128x128xf32, #tpu.memory_space<vmem>>, vector<1x128x128xf32>
    %20 = vector.shape_cast %19 : vector<1x128x128xf32> to vector<128x128xf32>
    %c0_12 = arith.constant 0 : index
    %c0_13 = arith.constant 0 : index
    %c0_14 = arith.constant 0 : index
    %21 = vector.load %arg7[%c0_12, %c0_13, %c0_14] : memref<1x128x128xf32, #tpu.memory_space<vmem>>, vector<1x128x128xf32>
    %22 = vector.shape_cast %21 : vector<1x128x128xf32> to vector<128x128xf32>
    %cst_15 = arith.constant dense<0.000000e+00> : vector<128x128xf32>
    %23 = tpu.matmul %20, %22, %cst_15 {dimension_numbers = #tpu.dot_dimension_numbers<[1], [0], [0], [1], [0, 0, 1, 1], [], []>} : vector<128x128xf32>, vector<128x128xf32>, vector<128x128xf32> -> vector<128x128xf32>
    %c0_16 = arith.constant 0 : index
    %c0_17 = arith.constant 0 : index
    %c0_18 = arith.constant 0 : index
    %24 = vector.load %arg8[%c0_16, %c0_17, %c0_18] : memref<1x1x128xf32, #tpu.memory_space<vmem>>, vector<1x1x128xf32>
    %25 = vector.shape_cast %24 : vector<1x1x128xf32> to vector<1x128xf32>
    %26 = vector.broadcast %25 : vector<1x128xf32> to vector<128x128xf32>
    %27 = arith.addf %23, %26 : vector<128x128xf32>
    %28 = math.tanh %27 : vector<128x128xf32>
    %cst_19 = arith.constant dense<0.000000e+00> : vector<8x128xf32>
    %29 = tpu.matmul %18, %28, %cst_19 {dimension_numbers = #tpu.dot_dimension_numbers<[1], [1], [0], [0], [0, 0, 1, 0], [], []>} : vector<8x128xf32>, vector<128x128xf32>, vector<8x128xf32> -> vector<8x128xf32>
    %cst_20 = arith.constant dense<0.000000e+00> : vector<128xf32>
    %30 = vector.multi_reduction <add>, %29, %cst_20 [0] : vector<8x128xf32> to vector<128xf32>
    %31 = vector.shape_cast %30 : vector<128xf32> to vector<1x128xf32>
    %32 = tpu.iota {dimensions = array<i32: 1>} : vector<1x128xi32>
    %33 = arith.index_cast %arg0 : i32 to index
    %34 = memref.load %arg2[%33] : memref<5xi32, #tpu.memory_space<smem>>
    %35 = vector.broadcast %34 : i32 to vector<1x128xi32>
    %36 = arith.cmpi slt, %32, %35 : vector<1x128xi32>
    %cst_21 = arith.constant -1.000000e+30 : f32
    %37 = vector.broadcast %cst_21 : f32 to vector<1x128xf32>
    %38 = arith.select %36, %31, %37 : vector<1x128xi1>, vector<1x128xf32>
    %cst_22 = arith.constant dense<0xFF800000> : vector<1xf32>
    %39 = vector.multi_reduction <maximumf>, %38, %cst_22 [1] : vector<1x128xf32> to vector<1xf32>
    %40 = vector.shape_cast %39 : vector<1xf32> to vector<1x1xf32>
    %41 = vector.broadcast %40 : vector<1x1xf32> to vector<1x128xf32>
    %42 = arith.subf %38, %41 : vector<1x128xf32>
    %43 = math.exp %42 : vector<1x128xf32>
    %cst_23 = arith.constant 0.000000e+00 : f32
    %44 = vector.broadcast %cst_23 : f32 to vector<1x128xf32>
    %45 = arith.select %36, %43, %44 : vector<1x128xi1>, vector<1x128xf32>
    %cst_24 = arith.constant dense<0.000000e+00> : vector<1xf32>
    %46 = vector.multi_reduction <add>, %45, %cst_24 [1] : vector<1x128xf32> to vector<1xf32>
    %47 = vector.shape_cast %46 : vector<1xf32> to vector<1x1xf32>
    %48 = vector.broadcast %47 : vector<1x1xf32> to vector<1x128xf32>
    %49 = arith.divf %45, %48 : vector<1x128xf32>
    %c0_25 = arith.constant 0 : index
    %c0_26 = arith.constant 0 : index
    %c0_27 = arith.constant 0 : index
    %50 = vector.load %arg9[%c0_25, %c0_26, %c0_27] : memref<1x1x128xf32, #tpu.memory_space<vmem>>, vector<1x1x128xf32>
    %51 = vector.shape_cast %50 : vector<1x1x128xf32> to vector<1x128xf32>
    %52 = vector.shape_cast %49 : vector<1x128xf32> to vector<1x1x128xf32>
    tpu.vector_store %arg9[%c0_25, %c0_26, %c0_27], %52 {strides = array<i32>} : memref<1x1x128xf32, #tpu.memory_space<vmem>>, vector<1x1x128xf32>,
    return
  }
  func.func @transform_0(%arg0: i32, %arg1: memref<5xi32, #tpu.memory_space<smem>>, %arg2: memref<5xi32, #tpu.memory_space<smem>>) -> (i32, i32, i32) {
    %c0_i32 = arith.constant 0 : i32
    %c0_i32_0 = arith.constant 0 : i32
    %c0_i32_1 = arith.constant 0 : i32
    return %arg0, %c0_i32, %c0_i32_0 : i32, i32, i32
  }
  func.func @transform_1(%arg0: i32, %arg1: memref<5xi32, #tpu.memory_space<smem>>, %arg2: memref<5xi32, #tpu.memory_space<smem>>) -> (i32, i32, i32) {
    %c0_i32 = arith.constant 0 : i32
    %c0_i32_0 = arith.constant 0 : i32
    %c0_i32_1 = arith.constant 0 : i32
    return %arg0, %c0_i32, %c0_i32_0 : i32, i32, i32
  }
  func.func @transform_2(%arg0: i32, %arg1: memref<5xi32, #tpu.memory_space<smem>>, %arg2: memref<5xi32, #tpu.memory_space<smem>>) -> (i32, i32, i32) {
    %c0_i32 = arith.constant 0 : i32
    %c0_i32_0 = arith.constant 0 : i32
    %c0_i32_1 = arith.constant 0 : i32
    return %arg0, %c0_i32, %c0_i32_0 : i32, i32, i32
  }
  func.func @transform_3(%arg0: i32, %arg1: memref<5xi32, #tpu.memory_space<smem>>, %arg2: memref<5xi32, #tpu.memory_space<smem>>) -> (i32, i32, i32) {
    %c0_i32 = arith.constant 0 : i32
    %c0_i32_0 = arith.constant 0 : i32
    %c0_i32_1 = arith.constant 0 : i32
    return %arg0, %c0_i32, %c0_i32_0 : i32, i32, i32
  }
  func.func @transform_4(%arg0: i32, %arg1: memref<5xi32, #tpu.memory_space<smem>>, %arg2: memref<5xi32, #tpu.memory_space<smem>>) -> (i32, i32, i32) {
    %c0_i32 = arith.constant 0 : i32
    %c0_i32_0 = arith.constant 0 : i32
    %c0_i32_1 = arith.constant 0 : i32
    return %arg0, %c0_i32, %c0_i32_0 : i32, i32, i32
  }
  func.func @transform_5(%arg0: i32, %arg1: memref<5xi32, #tpu.memory_space<smem>>, %arg2: memref<5xi32, #tpu.memory_space<smem>>) -> (i32, i32, i32) {
    %c0_i32 = arith.constant 0 : i32
    %c0_i32_0 = arith.constant 0 : i32
    %c0_i32_1 = arith.constant 0 : i32
    return %arg0, %c0_i32, %c0_i32_0 : i32, i32, i32
  }
  func.func @transform_6(%arg0: i32, %arg1: memref<5xi32, #tpu.memory_space<smem>>, %arg2: memref<5xi32, #tpu.memory_space<smem>>) -> (i32, i32, i32) {
    %c0_i32 = arith.constant 0 : i32
    %c0_i32_0 = arith.constant 0 : i32
    %c0_i32_1 = arith.constant 0 : i32
    return %arg0, %c0_i32, %c0_i32_0 : i32, i32, i32
  }
}

</mosaic_0001>

<llo_original>
// kernel: tpu_custom_call.1
$region0: #{tpu_custom_call.1}
  #allocation0 [shape = 'u32[]', space=smem, size = 0x4, offset = 0x4, fixed_abs, tag = 'smem constant byte address 0x4 - core index']
  #allocation1 [shape = 'u32[72,128]{1,0:T(1,128)}', space=vmem, size = 0x9000, scoped, tag = 'internal scratch']
  #allocation2 [shape = 's32[1]{0}', space=sflag, size = 0x4, scoped, tag = 'scoped memory for tpu_custom_call.1']
  #allocation3 [shape = 'u8[512]{0}', space=smem, size = 0x200, scoped, tag = 'prefetched SMEM operand 0']
  #allocation4 [shape = 'u8[512]{0}', space=smem, size = 0x200, scoped, tag = 'prefetched SMEM operand 1']
  %s0 = inlined_call_operand.hbm [shape: s32[5], index: 0, kind: input, shape index: {}]
  %s1 = inlined_call_operand.hbm [shape: s32[5], index: 1, kind: input, shape index: {}]
  %s2 = inlined_call_operand.hbm [shape: f32[5,8,128], index: 2, kind: input, shape index: {}]
  %s3 = inlined_call_operand.hbm [shape: f32[5,128,128], index: 3, kind: input, shape index: {}]
  %s4 = inlined_call_operand.hbm [shape: f32[5,128,128], index: 4, kind: input, shape index: {}]
  %s5 = inlined_call_operand.hbm [shape: f32[5,1,128], index: 5, kind: input, shape index: {}]
  %s6 = inlined_call_operand.hbm [shape: f32[5,128,128], index: 6, kind: input, shape index: {}]
  %s7 = inlined_call_operand.vmem [shape: f32[5,1,128], index: 7, kind: input, shape index: {}]
  %s8 = inlined_call_operand.hbm [shape: f32[5,1,128], index: 8, kind: output, shape index: {}]
  %s9 = sld [smem:[#allocation0]]
  $region77: #{tpu_custom_call.1} parent=0
    _
  %s11 = ssub.s32 1, %s9
  %s12 = scalar_select 0, %s11, %s9
  %s14 = sshll.u32 %s0, 4
  %s15 = int_to_ptr.hbm [resolvable:$true] %s14
  %17 = dma.hbm_to_smem %s15, 16, [#allocation3], [#allocation2]
  %s19 = sshll.u32 %s1, 4
  %s20 = int_to_ptr.hbm [resolvable:$true] %s19
  %22 = dma.hbm_to_smem %s20, 16, [#allocation4], [#allocation2]
  %24 = dma.done [#allocation2], 32
  %25 = sfence
  $region1: #{tpu_custom_call.1} parent=0
    #allocation5 [shape = 'u8[8192]{0}', space=vmem, size = 0x2000, scoped, tag = 'input window, operand 2']
    #allocation6 [shape = 's32[2]{0}', space=sflag, size = 0x8, scoped, tag = 'scoped memory for tpu_custom_call.1']
    #allocation7 [shape = 's32[2]{0}', space=sflag, size = 0x8, scoped, tag = 'scoped memory for tpu_custom_call.1']
    #allocation8 [shape = 'u8[131072]{0}', space=vmem, size = 0x20000, scoped, tag = 'input window, operand 3']
    #allocation9 [shape = 's32[2]{0}', space=sflag, size = 0x8, scoped, tag = 'scoped memory for tpu_custom_call.1']
    #allocation10 [shape = 'u8[131072]{0}', space=vmem, size = 0x20000, scoped, tag = 'input window, operand 4']
    #allocation11 [shape = 'u8[1024]{0}', space=vmem, size = 0x400, scoped, tag = 'input window, operand 5']
    #allocation12 [shape = 's32[2]{0}', space=sflag, size = 0x8, scoped, tag = 'scoped memory for tpu_custom_call.1']
    #allocation13 [shape = 'u8[131072]{0}', space=vmem, size = 0x20000, scoped, tag = 'input window, operand 6']
    #allocation14 [shape = 'u8[1024]{0}', space=vmem, size = 0x400, scoped, tag = 'output window, operand 0']
    %26 = vsyncpa [#allocation6], 0
    %s27 = scalar_lea.sflag [#allocation6], 1
    %28 = vsyncpa %s27, 0
    %29 = vsyncpa [#allocation9], 0
    %s30 = scalar_lea.sflag [#allocation9], 1
    %31 = vsyncpa %s30, 0
    %32 = vsyncpa [#allocation12], 0
    %s33 = scalar_lea.sflag [#allocation12], 1
    %34 = vsyncpa %s33, 0
    %35 = vsyncpa [#allocation7], 0
    %s36 = scalar_lea.sflag [#allocation7], 1
    %37 = vsyncpa %s36, 0
    loop: start=0, step=1, limit=7
    $region2: #{tpu_custom_call.1} parent=1 // loop_pre_header
      _
    $region3: #{tpu_custom_call.1} parent=1 // loop_header
      %s39 = sphi 0, %s43
      %p40 = scmp.ge.s32.totalorder %s39, 7
      %s49 = sphi 0, %s51
      %s52 = sphi 0, %s49
      %s53 = sphi 0, %s52
      %s69 = sphi 0, %s53
      %s75 = sphi 0, %s77
      %s78 = sphi 0, %s75
      %s79 = sphi 0, %s78
      %s95 = sphi 0, %s79
      %s101 = sphi 0, %s103
      %s104 = sphi 0, %s101
      %s105 = sphi 0, %s104
      %s121 = sphi 0, %s105
      %s127 = sphi 0, %s129
      %s130 = sphi 0, %s127
      %s131 = sphi 0, %s130
      %s147 = sphi 0, %s131
      %s153 = sphi 0, %s155
      %s156 = sphi 0, %s153
      %s157 = sphi 0, %s156
      %s173 = sphi 0, %s157
      %s179 = sphi 0, %s181
      %s182 = sphi 0, %s179
      %s183 = sphi 0, %s182
      %s199 = sphi 0, %s183
      %s205 = sphi 0, %s207
      %s208 = sphi 0, %s205
      %s209 = sphi 0, %s208
      %s225 = sphi 0, %s209
    $region4: #{tpu_custom_call.1} parent=1 // loop_header_branch
      %42 = sbr.rel (%p40) target = $region8
    $region5: #{tpu_custom_call.1} parent=1 // loop_body
      %s44 = ssub.s32 %s39, 1
      %s45 = ssub.s32 %s39, 2
      %s46 = sadd.s32 %s39, 1
      %s47 = ssub.s32 %s39, %s46
      %p48 = scmp.eq.s32.totalorder %s47, 0
      %s50 = sadd.s32 %s49, 1
      %s51 = scalar_select %p48, %s49, %s50
      %p54 = pneg %p48
      %p55 = scmp.eq.s32.totalorder %s39, 4
      %p56 = por %p54, %p55
      %p57 = scmp.ne.s32.totalorder %s49, %s52
      %p58 = scmp.eq.s32.totalorder %s39, 0
      %p59 = por %p57, %p58
      %p60 = scmp.ne.s32.totalorder %s49, %s52
      %p61 = scmp.eq.s32.totalorder %s44, 4
      %p62 = por %p60, %p61
      %p63 = scmp.ne.s32.totalorder %s52, %s53
      %p64 = scmp.eq.s32.totalorder %s44, 0
      %p65 = por %p63, %p64
      %p66 = scmp.ne.s32.totalorder %s52, %s53
      %p67 = scmp.eq.s32.totalorder %s45, 4
      %p68 = por %p66, %p67
      %p70 = scmp.ne.s32.totalorder %s53, %s69
      %p71 = scmp.eq.s32.totalorder %s45, 0
      %p72 = por %p70, %p71
      %s73 = ssub.s32 %s39, %s46
      %p74 = scmp.eq.s32.totalorder %s73, 0
      %s76 = sadd.s32 %s75, 1
      %s77 = scalar_select %p74, %s75, %s76
      %p80 = pneg %p74
      %p81 = scmp.eq.s32.totalorder %s39, 4
      %p82 = por %p80, %p81
      %p83 = scmp.ne.s32.totalorder %s75, %s78
      %p84 = scmp.eq.s32.totalorder %s39, 0
      %p85 = por %p83, %p84
      %p86 = scmp.ne.s32.totalorder %s75, %s78
      %p87 = scmp.eq.s32.totalorder %s44, 4
      %p88 = por %p86, %p87
      %p89 = scmp.ne.s32.totalorder %s78, %s79
      %p90 = scmp.eq.s32.totalorder %s44, 0
      %p91 = por %p89, %p90
      %p92 = scmp.ne.s32.totalorder %s78, %s79
      %p93 = scmp.eq.s32.totalorder %s45, 4
      %p94 = por %p92, %p93
      %p96 = scmp.ne.s32.totalorder %s79, %s95
      %p97 = scmp.eq.s32.totalorder %s45, 0
      %p98 = por %p96, %p97
      %s99 = ssub.s32 %s39, %s46
      %p100 = scmp.eq.s32.totalorder %s99, 0
      %s102 = sadd.s32 %s101, 1
      %s103 = scalar_select %p100, %s101, %s102
      %p106 = pneg %p100
      %p107 = scmp.eq.s32.totalorder %s39, 4
      %p108 = por %p106, %p107
      %p109 = scmp.ne.s32.totalorder %s101, %s104
      %p110 = scmp.eq.s32.totalorder %s39, 0
      %p111 = por %p109, %p110
      %p112 = scmp.ne.s32.totalorder %s101, %s104
      %p113 = scmp.eq.s32.totalorder %s44, 4
      %p114 = por %p112, %p113
      %p115 = scmp.ne.s32.totalorder %s104, %s105
      %p116 = scmp.eq.s32.totalorder %s44, 0
      %p117 = por %p115, %p116
      %p118 = scmp.ne.s32.totalorder %s104, %s105
      %p119 = scmp.eq.s32.totalorder %s45, 4
      %p120 = por %p118, %p119
      %p122 = scmp.ne.s32.totalorder %s105, %s121
      %p123 = scmp.eq.s32.totalorder %s45, 0
      %p124 = por %p122, %p123
      %s125 = ssub.s32 %s39, %s46
      %p126 = scmp.eq.s32.totalorder %s125, 0
      %s128 = sadd.s32 %s127, 1
      %s129 = scalar_select %p126, %s127, %s128
      %p132 = pneg %p126
      %p133 = scmp.eq.s32.totalorder %s39, 4
      %p134 = por %p132, %p133
      %p135 = scmp.ne.s32.totalorder %s127, %s130
      %p136 = scmp.eq.s32.totalorder %s39, 0
      %p137 = por %p135, %p136
      %p138 = scmp.ne.s32.totalorder %s127, %s130
      %p139 = scmp.eq.s32.totalorder %s44, 4
      %p140 = por %p138, %p139
      %p141 = scmp.ne.s32.totalorder %s130, %s131
      %p142 = scmp.eq.s32.totalorder %s44, 0
      %p143 = por %p141, %p142
      %p144 = scmp.ne.s32.totalorder %s130, %s131
      %p145 = scmp.eq.s32.totalorder %s45, 4
      %p146 = por %p144, %p145
      %p148 = scmp.ne.s32.totalorder %s131, %s147
      %p149 = scmp.eq.s32.totalorder %s45, 0
      %p150 = por %p148, %p149
      %s151 = ssub.s32 %s39, %s46
      %p152 = scmp.eq.s32.totalorder %s151, 0
      %s154 = sadd.s32 %s153, 1
      %s155 = scalar_select %p152, %s153, %s154
      %p158 = pneg %p152
      %p159 = scmp.eq.s32.totalorder %s39, 4
      %p160 = por %p158, %p159
      %p161 = scmp.ne.s32.totalorder %s153, %s156
      %p162 = scmp.eq.s32.totalorder %s39, 0
      %p163 = por %p161, %p162
      %p164 = scmp.ne.s32.totalorder %s153, %s156
      %p165 = scmp.eq.s32.totalorder %s44, 4
      %p166 = por %p164, %p165
      %p167 = scmp.ne.s32.totalorder %s156, %s157
      %p168 = scmp.eq.s32.totalorder %s44, 0
      %p169 = por %p167, %p168
      %p170 = scmp.ne.s32.totalorder %s156, %s157
      %p171 = scmp.eq.s32.totalorder %s45, 4
      %p172 = por %p170, %p171
      %p174 = scmp.ne.s32.totalorder %s157, %s173
      %p175 = scmp.eq.s32.totalorder %s45, 0
      %p176 = por %p174, %p175
      %s177 = ssub.s32 %s39, %s46
      %p178 = scmp.eq.s32.totalorder %s177, 0
      %s180 = sadd.s32 %s179, 1
      %s181 = scalar_select %p178, %s179, %s180
      %p184 = pneg %p178
      %p185 = scmp.eq.s32.totalorder %s39, 4
      %p186 = por %p184, %p185
      %p187 = scmp.ne.s32.totalorder %s179, %s182
      %p188 = scmp.eq.s32.totalorder %s39, 0
      %p189 = por %p187, %p188
      %p190 = scmp.ne.s32.totalorder %s179, %s182
      %p191 = scmp.eq.s32.totalorder %s44, 4
      %p192 = por %p190, %p191
      %p193 = scmp.ne.s32.totalorder %s182, %s183
      %p194 = scmp.eq.s32.totalorder %s44, 0
      %p195 = por %p193, %p194
      %p196 = scmp.ne.s32.totalorder %s182, %s183
      %p197 = scmp.eq.s32.totalorder %s45, 4
      %p198 = por %p196, %p197
      %p200 = scmp.ne.s32.totalorder %s183, %s199
      %p201 = scmp.eq.s32.totalorder %s45, 0
      %p202 = por %p200, %p201
      %s203 = ssub.s32 %s39, %s46
      %p204 = scmp.eq.s32.totalorder %s203, 0
      %s206 = sadd.s32 %s205, 1
      %s207 = scalar_select %p204, %s205, %s206
      %p210 = pneg %p204
      %p211 = scmp.eq.s32.totalorder %s39, 4
      %p212 = por %p210, %p211
      %p213 = scmp.ne.s32.totalorder %s205, %s208
      %p214 = scmp.eq.s32.totalorder %s39, 0
      %p215 = por %p213, %p214
      %p216 = scmp.ne.s32.totalorder %s205, %s208
      %p217 = scmp.eq.s32.totalorder %s44, 4
      %p218 = por %p216, %p217
      %p219 = scmp.ne.s32.totalorder %s208, %s209
      %p220 = scmp.eq.s32.totalorder %s44, 0
      %p221 = por %p219, %p220
      %p222 = scmp.ne.s32.totalorder %s208, %s209
      %p223 = scmp.eq.s32.totalorder %s45, 4
      %p224 = por %p222, %p223
      %p226 = scmp.ne.s32.totalorder %s209, %s225
      %p227 = scmp.eq.s32.totalorder %s45, 0
      %p228 = por %p226, %p227
      %p229 = scmp.le.s32.totalorder 1, %s39
      %p230 = scmp.lt.s32.totalorder %s39, 6
      %p231 = pnand %p229, %p230
      %p232 = pneg %p231
      // Predicated region
      $region9: #{tpu_custom_call.1} parent=5 // pred_check
        _
      $region10: #{tpu_custom_call.1} parent=5 // pred_check_branch
        %234 = sbr.rel (%p231) target = $region12
      $region11: #{tpu_custom_call.1} parent=5 // pred_region
        %s235 = ssub.s32 %s39, 1
      $region12: #{tpu_custom_call.1} parent=5 // pred_fallthru
        _
      %p236 = scmp.lt.s32.totalorder %s39, 5
      // Predicated region
      $region13: #{tpu_custom_call.1} parent=5 // pred_check
        %p237 = pneg %p236
      $region14: #{tpu_custom_call.1} parent=5 // pred_check_branch
        %239 = sbr.rel (%p237) target = $region16
      $region15: #{tpu_custom_call.1} parent=5 // pred_region
        // Predicated region
        $region17: #{tpu_custom_call.1} parent=15 // pred_check
          %p240 = pneg %p59
        $region18: #{tpu_custom_call.1} parent=15 // pred_check_branch
          %242 = sbr.rel (%p240) target = $region20
        $region19: #{tpu_custom_call.1} parent=15 // pred_region
          %s243 = sand.u32 %s49, 1
          %s244 = scalar_lea.sflag [#allocation6], %s243
          %s245 = sand.u32 %s49, 1
          %s246 = smul.addr %s245, 8
          %s247 = scalar_lea.vmem [#allocation5], %s246
          %249 = vsyncadd %s244, 0
          %s250 = smul.addr %s39, 8
          %s251 = scalar_lea.hbm %s2, %s250
          %s253 = sshll.u32 %s251, 4
          %s254 = int_to_ptr.hbm [resolvable:$true] %s253
          %s255 = sshll.u32 %s247, 4
          %s256 = int_to_ptr.vmem [resolvable:$true] %s255
          %258 = dma.hbm_to_vmem [thread:$0]  %s254, 128, %s256, %s244
        $region20: #{tpu_custom_call.1} parent=15 // pred_fallthru
          _
        // Predicated region
        $region21: #{tpu_custom_call.1} parent=15 // pred_check
          %p259 = pneg %p85
        $region22: #{tpu_custom_call.1} parent=15 // pred_check_branch
          %261 = sbr.rel (%p259) target = $region24
        $region23: #{tpu_custom_call.1} parent=15 // pred_region
          %s262 = sand.u32 %s39, 1
          %s263 = scalar_lea.sflag [#allocation9], %s262
          %s264 = sand.u32 %s75, 1
          %s265 = smul.addr %s264, 128
          %s266 = scalar_lea.vmem [#allocation8], %s265
          %268 = vsyncadd %s263, 0
          %s269 = smul.addr %s39, 16
          %s270 = smul.addr %s269, 8
          %s271 = scalar_lea.hbm %s3, %s270
          %s272 = sshll.u32 %s271, 4
          %s273 = int_to_ptr.hbm [resolvable:$true] %s272
          %s274 = sshll.u32 %s266, 4
          %s275 = int_to_ptr.vmem [resolvable:$true] %s274
          %280 = dma.hbm_to_vmem [thread:$0]  %s273, 2048, %s275, %s263, 128, 128, 8
        $region24: #{tpu_custom_call.1} parent=15 // pred_fallthru
          _
        // Predicated region
        $region25: #{tpu_custom_call.1} parent=15 // pred_check
          %p281 = pneg %p111
        $region26: #{tpu_custom_call.1} parent=15 // pred_check_branch
          %283 = sbr.rel (%p281) target = $region28
        $region27: #{tpu_custom_call.1} parent=15 // pred_region
          %s284 = sand.u32 %s39, 1
          %s285 = scalar_lea.sflag [#allocation9], %s284
          %s286 = sand.u32 %s101, 1
          %s287 = smul.addr %s286, 128
          %s288 = scalar_lea.vmem [#allocation10], %s287
          %290 = vsyncadd %s285, 0
          %s291 = smul.addr %s39, 16
          %s292 = smul.addr %s291, 8
          %s293 = scalar_lea.hbm %s4, %s292
          %s294 = sshll.u32 %s293, 4
          %s295 = int_to_ptr.hbm [resolvable:$true] %s294
          %s296 = sshll.u32 %s288, 4
          %s297 = int_to_ptr.vmem [resolvable:$true] %s296
          %302 = dma.hbm_to_vmem [thread:$0]  %s295, 2048, %s297, %s285, 128, 128, 8
        $region28: #{tpu_custom_call.1} parent=15 // pred_fallthru
          _
        // Predicated region
        $region29: #{tpu_custom_call.1} parent=15 // pred_check
          %p303 = pneg %p137
        $region30: #{tpu_custom_call.1} parent=15 // pred_check_branch
          %305 = sbr.rel (%p303) target = $region32
        $region31: #{tpu_custom_call.1} parent=15 // pred_region
          %s306 = sand.u32 %s39, 1
          %s307 = scalar_lea.sflag [#allocation12], %s306
          %s308 = sand.u32 %s127, 1
          %s309 = scalar_lea.vmem [#allocation11], %s308
          %311 = vsyncadd %s307, 0
          %s312 = scalar_lea.hbm %s5, %s39
          %s314 = sshll.u32 %s312, 4
          %s315 = int_to_ptr.hbm [resolvable:$true] %s314
          %s316 = sshll.u32 %s309, 4
          %s317 = int_to_ptr.vmem [resolvable:$true] %s316
          %319 = dma.hbm_to_vmem [thread:$0]  %s315, 16, %s317, %s307
        $region32: #{tpu_custom_call.1} parent=15 // pred_fallthru
          _
        // Predicated region
        $region33: #{tpu_custom_call.1} parent=15 // pred_check
          %p320 = pneg %p163
        $region34: #{tpu_custom_call.1} parent=15 // pred_check_branch
          %322 = sbr.rel (%p320) target = $region36
        $region35: #{tpu_custom_call.1} parent=15 // pred_region
          %s323 = sand.u32 %s39, 1
          %s324 = scalar_lea.sflag [#allocation12], %s323
          %s325 = sand.u32 %s153, 1
          %s326 = smul.addr %s325, 128
          %s327 = scalar_lea.vmem [#allocation13], %s326
          %329 = vsyncadd %s324, 0
          %s330 = smul.addr %s39, 16
          %s331 = smul.addr %s330, 8
          %s332 = scalar_lea.hbm %s6, %s331
          %s333 = sshll.u32 %s332, 4
          %s334 = int_to_ptr.hbm [resolvable:$true] %s333
          %s335 = sshll.u32 %s327, 4
          %s336 = int_to_ptr.vmem [resolvable:$true] %s335
          %341 = dma.hbm_to_vmem [thread:$0]  %s334, 2048, %s336, %s324, 128, 128, 8
        $region36: #{tpu_custom_call.1} parent=15 // pred_fallthru
          _
        // Predicated region
        $region37: #{tpu_custom_call.1} parent=15 // pred_check
          %p342 = pneg %p189
        $region38: #{tpu_custom_call.1} parent=15 // pred_check_branch
          %344 = sbr.rel (%p342) target = $region40
        $region39: #{tpu_custom_call.1} parent=15 // pred_region
          %p345 = scmp.lt.s32.totalorder %s39, 4
          %s346 = scalar_select %p345, %s39, 4
          %s347 = scalar_lea.vmem %s7, %s346
        $region40: #{tpu_custom_call.1} parent=15 // pred_fallthru
          _
      $region16: #{tpu_custom_call.1} parent=5 // pred_fallthru
        _
      %p348 = scmp.le.s32.totalorder 1, %s39
      %p349 = scmp.lt.s32.totalorder %s39, 6
      %p350 = pnand %p348, %p349
      %p351 = pneg %p350
      // Predicated region
      $region41: #{tpu_custom_call.1} parent=5 // pred_check
        _
      $region42: #{tpu_custom_call.1} parent=5 // pred_check_branch
        %353 = sbr.rel (%p350) target = $region44
      $region43: #{tpu_custom_call.1} parent=5 // pred_region
        %s354 = ssub.s32 %s39, 1
        %s355 = sand.u32 %s52, 1
        %s356 = scalar_lea.sflag [#allocation6], %s355
        %s357 = sand.u32 %s52, 1
        %s358 = smul.addr %s357, 8
        %s359 = scalar_lea.vmem [#allocation5], %s358
        // Predicated region
        $region45: #{tpu_custom_call.1} parent=43 // pred_check
          %p360 = pneg %p65
        $region46: #{tpu_custom_call.1} parent=43 // pred_check_branch
          %362 = sbr.rel (%p360) target = $region48
        $region47: #{tpu_custom_call.1} parent=43 // pred_region
          %364 = dma.done %s356, 128
        $region48: #{tpu_custom_call.1} parent=43 // pred_fallthru
          _
        %s365 = sand.u32 %s44, 1
        %s366 = scalar_lea.sflag [#allocation9], %s365
        %s367 = sand.u32 %s78, 1
        %s368 = smul.addr %s367, 128
        %s369 = scalar_lea.vmem [#allocation8], %s368
        // Predicated region
        $region49: #{tpu_custom_call.1} parent=43 // pred_check
          %p370 = pneg %p91
        $region50: #{tpu_custom_call.1} parent=43 // pred_check_branch
          %372 = sbr.rel (%p370) target = $region52
        $region51: #{tpu_custom_call.1} parent=43 // pred_region
          %374 = dma.done %s366, 2048
        $region52: #{tpu_custom_call.1} parent=43 // pred_fallthru
          _
        %s375 = sand.u32 %s44, 1
        %s376 = scalar_lea.sflag [#allocation9], %s375
        %s377 = sand.u32 %s104, 1
        %s378 = smul.addr %s377, 128
        %s379 = scalar_lea.vmem [#allocation10], %s378
        // Predicated region
        $region53: #{tpu_custom_call.1} parent=43 // pred_check
          %p380 = pneg %p117
        $region54: #{tpu_custom_call.1} parent=43 // pred_check_branch
          %382 = sbr.rel (%p380) target = $region56
        $region55: #{tpu_custom_call.1} parent=43 // pred_region
          %384 = dma.done %s376, 2048
        $region56: #{tpu_custom_call.1} parent=43 // pred_fallthru
          _
        %s385 = sand.u32 %s44, 1
        %s386 = scalar_lea.sflag [#allocation12], %s385
        %s387 = sand.u32 %s130, 1
        %s388 = scalar_lea.vmem [#allocation11], %s387
        // Predicated region
        $region57: #{tpu_custom_call.1} parent=43 // pred_check
          %p389 = pneg %p143
        $region58: #{tpu_custom_call.1} parent=43 // pred_check_branch
          %391 = sbr.rel (%p389) target = $region60
        $region59: #{tpu_custom_call.1} parent=43 // pred_region
          %393 = dma.done %s386, 16
        $region60: #{tpu_custom_call.1} parent=43 // pred_fallthru
          _
        %s394 = sand.u32 %s44, 1
        %s395 = scalar_lea.sflag [#allocation12], %s394
        %s396 = sand.u32 %s156, 1
        %s397 = smul.addr %s396, 128
        %s398 = scalar_lea.vmem [#allocation13], %s397
        // Predicated region
        $region61: #{tpu_custom_call.1} parent=43 // pred_check
          %p399 = pneg %p169
        $region62: #{tpu_custom_call.1} parent=43 // pred_check_branch
          %401 = sbr.rel (%p399) target = $region64
        $region63: #{tpu_custom_call.1} parent=43 // pred_region
          %403 = dma.done %s395, 2048
        $region64: #{tpu_custom_call.1} parent=43 // pred_fallthru
          _
        %s404 = sand.u32 %s52, 1
        %s405 = scalar_lea.sflag [#allocation6], %s404
        %s406 = sand.u32 %s52, 1
        %s407 = smul.addr %s406, 8
        %s408 = scalar_lea.vmem [#allocation5], %s407
        %p409 = pneg %p65
        %p410 = pneg %p62
        %s411 = sand.u32 %s44, 1
        %s412 = scalar_lea.sflag [#allocation9], %s411
        %s413 = sand.u32 %s78, 1
        %s414 = smul.addr %s413, 128
        %s415 = scalar_lea.vmem [#allocation8], %s414
        %p416 = pneg %p91
        %p417 = pneg %p88
        %s418 = sand.u32 %s44, 1
        %s419 = scalar_lea.sflag [#allocation9], %s418
        %s420 = sand.u32 %s104, 1
        %s421 = smul.addr %s420, 128
        %s422 = scalar_lea.vmem [#allocation10], %s421
        %p423 = pneg %p117
        %p424 = pneg %p114
        %s425 = sand.u32 %s44, 1
        %s426 = scalar_lea.sflag [#allocation12], %s425
        %s427 = sand.u32 %s130, 1
        %s428 = scalar_lea.vmem [#allocation11], %s427
        %p429 = pneg %p143
        %p430 = pneg %p140
        %s431 = sand.u32 %s44, 1
        %s432 = scalar_lea.sflag [#allocation12], %s431
        %s433 = sand.u32 %s156, 1
        %s434 = smul.addr %s433, 128
        %s435 = scalar_lea.vmem [#allocation13], %s434
        %p436 = pneg %p169
        %p437 = pneg %p166
        %p438 = scmp.lt.s32.totalorder %s44, 4
        %s439 = scalar_select %p438, %s44, 4
        %s440 = scalar_lea.vmem %s7, %s439
        %p441 = pneg %p195
        %p442 = pneg %p192
        %p443 = pneg %p221
        %p444 = pneg %p218
        %s445 = sand.u32 %s208, 1
        %s446 = scalar_lea.sflag [#allocation7], %s445
        %s447 = sand.u32 %s208, 1
        %s448 = scalar_lea.vmem [#allocation14], %s447
        %p449 = scmp.lt.s32.totalorder %s44, 4
        %s450 = scalar_select %p449, %s44, 4
        %s451 = scalar_lea.vmem %s7, %s450
        %v452 = vld [vmem:[%s359] sm:$0xff]
        %v453 = vld [vmem:[%s379] sm:$0xff]
        %v454 = vld [vmem:[%s379 + $0x8] sm:$0xff]
        %v455 = vld [vmem:[%s379 + $0x10] sm:$0xff]
        %v456 = vld [vmem:[%s379 + $0x18] sm:$0xff]
        %v457 = vld [vmem:[%s379 + $0x20] sm:$0xff]
        %v458 = vld [vmem:[%s379 + $0x28] sm:$0xff]
        %v459 = vld [vmem:[%s379 + $0x30] sm:$0xff]
        %v460 = vld [vmem:[%s379 + $0x38] sm:$0xff]
        %v461 = vld [vmem:[%s379 + $0x40] sm:$0xff]
        %v462 = vld [vmem:[%s379 + $0x48] sm:$0xff]
        %v463 = vld [vmem:[%s379 + $0x50] sm:$0xff]
        %v464 = vld [vmem:[%s379 + $0x58] sm:$0xff]
        %v465 = vld [vmem:[%s379 + $0x60] sm:$0xff]
        %v466 = vld [vmem:[%s379 + $0x68] sm:$0xff]
        %v467 = vld [vmem:[%s379 + $0x70] sm:$0xff]
        %v468 = vld [vmem:[%s379 + $0x78] sm:$0xff]
        %v469 = vld [vmem:[%s388] sm:$0x1]
        %v471 = vperm.slane %v469, 0
        %473 = vmatpush.msra.mxu0 %v468
        %474 = vmatpush.msra.mxu0 %v467
        %475 = vmatpush.msra.mxu0 %v466
        %476 = vmatpush.msra.mxu0 %v465
        %477 = vmatpush.msra.mxu0 %v464
        %478 = vmatpush.msra.mxu0 %v463
        %479 = vmatpush.msra.mxu0 %v462
        %480 = vmatpush.msra.mxu0 %v461
        %481 = vmatpush.msra.mxu0 %v460
        %482 = vmatpush.msra.mxu0 %v459
        %483 = vmatpush.msra.mxu0 %v458
        %484 = vmatpush.msra.mxu0 %v457
        %485 = vmatpush.msra.mxu0 %v456
        %486 = vmatpush.msra.mxu0 %v455
        %487 = vmatpush.msra.mxu0 %v454
        %488 = vmatpush.msra.mxu0 %v453
        %489 = vmatmul.f32.gmra.mxu0 %v452
        %v490 = vpop.f32.mrf.mxu0
        %v491 = vadd.f32 %v471, %v490
        %492 = vdwg.mxu0
        %v493 = vtanh.pop %v491
        %v494 = vlaneseq
        %v495 = vshrl.u32 %v494, 7
        %s496 = sld [smem:[#allocation3 + %s44]]
        %v497 = vstv %s496
        %vm498 = vcmp.lt.s32.totalorder %v495, %v497
        %v499 = vsel %vm498, 1, 0
        %vm500 = vcmp.eq.s32.totalorder %v499, 1
        %v501 = vsel %vm500, %v493, 0.0
        %v502 = vld [vmem:[%s369] sm:$0xff]
        %v503 = vld [vmem:[%s369 + $0x8] sm:$0xff]
        %v504 = vld [vmem:[%s369 + $0x10] sm:$0xff]
        %v505 = vld [vmem:[%s369 + $0x18] sm:$0xff]
        %v506 = vld [vmem:[%s369 + $0x20] sm:$0xff]
        %v507 = vld [vmem:[%s369 + $0x28] sm:$0xff]
        %v508 = vld [vmem:[%s369 + $0x30] sm:$0xff]
        %v509 = vld [vmem:[%s369 + $0x38] sm:$0xff]
        %v510 = vld [vmem:[%s369 + $0x40] sm:$0xff]
        %v511 = vld [vmem:[%s369 + $0x48] sm:$0xff]
        %v512 = vld [vmem:[%s369 + $0x50] sm:$0xff]
        %v513 = vld [vmem:[%s369 + $0x58] sm:$0xff]
        %v514 = vld [vmem:[%s369 + $0x60] sm:$0xff]
        %v515 = vld [vmem:[%s369 + $0x68] sm:$0xff]
        %v516 = vld [vmem:[%s369 + $0x70] sm:$0xff]
        %v517 = vld [vmem:[%s369 + $0x78] sm:$0xff]
        %v518 = vld [vmem:[%s398] sm:$0xff]
        %v519 = vld [vmem:[%s398 + $0x8] sm:$0xff]
        %v520 = vld [vmem:[%s398 + $0x10] sm:$0xff]
        %v521 = vld [vmem:[%s398 + $0x18] sm:$0xff]
        %v522 = vld [vmem:[%s398 + $0x20] sm:$0xff]
        %v523 = vld [vmem:[%s398 + $0x28] sm:$0xff]
        %v524 = vld [vmem:[%s398 + $0x30] sm:$0xff]
        %v525 = vld [vmem:[%s398 + $0x38] sm:$0xff]
        %v526 = vld [vmem:[%s398 + $0x40] sm:$0xff]
        %v527 = vld [vmem:[%s398 + $0x48] sm:$0xff]
        %v528 = vld [vmem:[%s398 + $0x50] sm:$0xff]
        %v529 = vld [vmem:[%s398 + $0x58] sm:$0xff]
        %v530 = vld [vmem:[%s398 + $0x60] sm:$0xff]
        %v531 = vld [vmem:[%s398 + $0x68] sm:$0xff]
        %v532 = vld [vmem:[%s398 + $0x70] sm:$0xff]
        %v533 = vld [vmem:[%s398 + $0x78] sm:$0xff]
        %v534 = vld [vmem:[%s451] sm:$0x1]
        %v536 = vperm.slane %v534, 0
        %538 = vmatpush.msra.mxu0 %v533
        %539 = vmatpush.msra.mxu0 %v532
        %540 = vmatpush.msra.mxu0 %v531
        %541 = vmatpush.msra.mxu0 %v530
        %542 = vmatpush.msra.mxu0 %v529
        %543 = vmatpush.msra.mxu0 %v528
        %544 = vmatpush.msra.mxu0 %v527
        %545 = vmatpush.msra.mxu0 %v526
        %546 = vmatpush.msra.mxu0 %v525
        %547 = vmatpush.msra.mxu0 %v524
        %548 = vmatpush.msra.mxu0 %v523
        %549 = vmatpush.msra.mxu0 %v522
        %550 = vmatpush.msra.mxu0 %v521
        %551 = vmatpush.msra.mxu0 %v520
        %552 = vmatpush.msra.mxu0 %v519
        %553 = vmatpush.msra.mxu0 %v518
        %554 = vmatmul.f32.gmra.mxu0 %v502
        %v555 = vpop.f32.mrf.mxu0
        %v556 = vadd.f32 %v536, %v555
        %557 = vmatmul.f32.gmra.mxu0 %v503
        %v558 = vpop.f32.mrf.mxu0
        %v559 = vadd.f32 %v536, %v558
        %560 = vmatmul.f32.gmra.mxu0 %v504
        %v561 = vpop.f32.mrf.mxu0
        %v562 = vadd.f32 %v536, %v561
        %563 = vmatmul.f32.gmra.mxu0 %v505
        %v564 = vpop.f32.mrf.mxu0
        %v565 = vadd.f32 %v536, %v564
        %566 = vmatmul.f32.gmra.mxu0 %v506
        %v567 = vpop.f32.mrf.mxu0
        %v568 = vadd.f32 %v536, %v567
        %569 = vmatmul.f32.gmra.mxu0 %v507
        %v570 = vpop.f32.mrf.mxu0
        %v571 = vadd.f32 %v536, %v570
        %572 = vmatmul.f32.gmra.mxu0 %v508
        %v573 = vpop.f32.mrf.mxu0
        %v574 = vadd.f32 %v536, %v573
        %575 = vmatmul.f32.gmra.mxu0 %v509
        %v576 = vpop.f32.mrf.mxu0
        %v577 = vadd.f32 %v536, %v576
        %578 = vmatmul.f32.gmra.mxu0 %v510
        %v579 = vpop.f32.mrf.mxu0
        %v580 = vadd.f32 %v536, %v579
        %581 = vmatmul.f32.gmra.mxu0 %v511
        %v582 = vpop.f32.mrf.mxu0
        %v583 = vadd.f32 %v536, %v582
        %584 = vmatmul.f32.gmra.mxu0 %v512
        %v585 = vpop.f32.mrf.mxu0
        %v586 = vadd.f32 %v536, %v585
        %587 = vmatmul.f32.gmra.mxu0 %v513
        %v588 = vpop.f32.mrf.mxu0
        %v589 = vadd.f32 %v536, %v588
        %590 = vmatmul.f32.gmra.mxu0 %v514
        %v591 = vpop.f32.mrf.mxu0
        %v592 = vadd.f32 %v536, %v591
        %593 = vmatmul.f32.gmra.mxu0 %v515
        %v594 = vpop.f32.mrf.mxu0
        %v595 = vadd.f32 %v536, %v594
        %596 = vmatmul.f32.gmra.mxu0 %v516
        %v597 = vpop.f32.mrf.mxu0
        %v598 = vadd.f32 %v536, %v597
        %599 = vmatmul.f32.gmra.mxu0 %v517
        %v600 = vpop.f32.mrf.mxu0
        %v601 = vadd.f32 %v536, %v600
        %602 = vdwg.mxu0
        %v603 = vtanh.pop %v556
        %v604 = vtanh.pop %v559
        %v605 = vtanh.pop %v562
        %v606 = vtanh.pop %v565
        %v607 = vtanh.pop %v568
        %v608 = vtanh.pop %v571
        %v609 = vtanh.pop %v574
        %v610 = vtanh.pop %v577
        %v611 = vtanh.pop %v580
        %v612 = vtanh.pop %v583
        %v613 = vtanh.pop %v586
        %v614 = vtanh.pop %v589
        %v615 = vtanh.pop %v592
        %v616 = vtanh.pop %v595
        %v617 = vtanh.pop %v598
        %v618 = vtanh.pop %v601
        %619 = vmatpush.xpose.msra.mxu0 %v618
        %620 = vmatpush.xpose.msra.mxu0 %v617
        %621 = vmatpush.xpose.msra.mxu0 %v616
        %622 = vmatpush.xpose.msra.mxu0 %v615
        %623 = vmatpush.xpose.msra.mxu0 %v614
        %624 = vmatpush.xpose.msra.mxu0 %v613
        %625 = vmatpush.xpose.msra.mxu0 %v612
        %626 = vmatpush.xpose.msra.mxu0 %v611
        %627 = vmatpush.xpose.msra.mxu0 %v610
        %628 = vmatpush.xpose.msra.mxu0 %v609
        %629 = vmatpush.xpose.msra.mxu0 %v608
        %630 = vmatpush.xpose.msra.mxu0 %v607
        %631 = vmatpush.xpose.msra.mxu0 %v606
        %632 = vmatpush.xpose.msra.mxu0 %v605
        %633 = vmatpush.xpose.msra.mxu0 %v604
        %634 = vmatpush.xpose.msra.mxu0 %v603
        %635 = vmatmul.f32.gmra.mxu0 %v501
        %v636 = vpop.f32.mrf.mxu0
        %v637 = vadd.f32 0.0, %v636
        %638 = vdwg.mxu0
        %v639 = vrot.slane %v637, 4
        %v640 = vadd.f32 %v637, %v639
        %v641 = vrot.slane %v640, 2
        %v642 = vadd.f32 %v640, %v641
        %v643 = vrot.slane %v642, 1
        %v644 = vadd.f32 %v642, %v643
        %v645 = vlaneseq
        %v646 = vand.u32 %v645, 127
        %s647 = sld [smem:[#allocation4 + %s44]]
        %v648 = vstv %s647
        %vm649 = vcmp.lt.s32.totalorder %v646, %v648
        %v650 = vsel %vm649, %v644, -1e+30
        %651 = vmax.xlane.f32.xlu0 %v650
        %v652 = vpop.xlane.xlu0 %651
        %v653 = vsub.f32 %v650, %v652
        %v654 = vmul.f32 %v653, 1.442695
        %v655 = vpow.pop %v654
        %v656 = vsel %vm649, %v655, 0.0
        %657 = vadd.xlane.f32.xlu0 %v656
        %v658 = vpop.xlane.xlu0 %657
        %v659 = vrcp.pop %v658
        %v660 = vmul.f32 %v658, %v659
        %v661 = vsub.f32 1.0, %v660
        %v662 = vmul.f32 %v659, %v661
        %v663 = vadd.f32 %v659, %v662
        %vm664 = vweird.f32 %v658
        %vm665 = vweird.f32 %v659
        %vm666 = vmor %vm664, %vm665
        %v667 = vsel %vm666, %v659, %v663
        %v668 = vand.u32 2147483647, %v658
        %vm669 = vcmp.eq.f32.partialorder %v668, 8.507059e+37
        %v670 = vand.u32 %v658, 2147483648
        %v671 = vor.u32 1.1754944e-38, %v670
        %v672 = vsel %vm669, %v671, %v667
        %v673 = vmul.f32 %v656, %v672
        %674 = vst [vmem:[%s448] sm:$0x1] %v673
        %s675 = sand.u32 %s208, 1
        %s676 = scalar_lea.sflag [#allocation7], %s675
        %s677 = sand.u32 %s208, 1
        %s678 = scalar_lea.vmem [#allocation14], %s677
        // Predicated region
        $region65: #{tpu_custom_call.1} parent=43 // pred_check
          %p679 = pneg %p218
        $region66: #{tpu_custom_call.1} parent=43 // pred_check_branch
          %681 = sbr.rel (%p679) target = $region68
        $region67: #{tpu_custom_call.1} parent=43 // pred_region
          %683 = vsyncadd %s676, 0
          %s684 = scalar_lea.hbm %s8, %s44
          %s686 = sshll.u32 %s678, 4
          %s687 = int_to_ptr.vmem [resolvable:$true] %s686
          %s688 = sshll.u32 %s684, 4
          %s689 = int_to_ptr.hbm [resolvable:$true] %s688
          %691 = dma.vmem_to_hbm [thread:$0]  %s687, 16, %s689, %s676
        $region68: #{tpu_custom_call.1} parent=43 // pred_fallthru
          _
      $region44: #{tpu_custom_call.1} parent=5 // pred_fallthru
        _
      %p692 = scmp.le.s32.totalorder 2, %s39
      // Predicated region
      $region69: #{tpu_custom_call.1} parent=5 // pred_check
        %p693 = pneg %p692
      $region70: #{tpu_custom_call.1} parent=5 // pred_check_branch
        %695 = sbr.rel (%p693) target = $region72
      $region71: #{tpu_custom_call.1} parent=5 // pred_region
        %s696 = ssub.s32 %s39, 2
        // Predicated region
        $region73: #{tpu_custom_call.1} parent=71 // pred_check
          %p697 = pneg %p224
        $region74: #{tpu_custom_call.1} parent=71 // pred_check_branch
          %699 = sbr.rel (%p697) target = $region76
        $region75: #{tpu_custom_call.1} parent=71 // pred_region
          %s700 = sand.u32 %s209, 1
          %s701 = scalar_lea.sflag [#allocation7], %s700
          %s702 = sand.u32 %s209, 1
          %s703 = scalar_lea.vmem [#allocation14], %s702
          %705 = dma.done %s701, 16
        $region76: #{tpu_custom_call.1} parent=71 // pred_fallthru
          _
      $region72: #{tpu_custom_call.1} parent=5 // pred_fallthru
        _
    $region6: #{tpu_custom_call.1} parent=1 // loop_footer
      %s43 = sadd.s32 1, %s39
    $region7: #{tpu_custom_call.1} parent=1 // loop_footer_branch
      %38 = sbr.rel target = $region3
    $region8: #{tpu_custom_call.1} parent=1 // loop_exit
      _
    %706 = vsyncpa [#allocation6], 1
    %s707 = scalar_lea.sflag [#allocation6], 1
    %708 = vsyncpa %s707, 1
    %709 = vsyncpa [#allocation9], 1
    %s710 = scalar_lea.sflag [#allocation9], 1
    %711 = vsyncpa %s710, 1
    %712 = vsyncpa [#allocation12], 1
    %s713 = scalar_lea.sflag [#allocation12], 1
    %714 = vsyncpa %s713, 1
    %715 = vsyncpa [#allocation7], 1
    %s716 = scalar_lea.sflag [#allocation7], 1
    %717 = vsyncpa %s716, 1

</llo_original>
